<compile_context>
chip_gen: v7x
topology: tpu7x:2x2x1
jax: 0.10.0
libtpu: 0.0.40
codegen_flags: <defaults>
</compile_context>

<pallas_src>
import jax
import jax.numpy as jnp
from jax.experimental import pallas as pl
from jax.experimental.pallas import tpu as pltpu


_LANES = 1024      # lane-dense last dim (multiple of 128) -> unmasked vector stores
_TILE_ROWS = 512   # (512, 1024) f32 = 2 MiB per buffer; 2 bufs in + 2 bufs out = 8 MiB
                   # -> fits v5e's 16 MiB scoped-VMEM default and v7x's smaller VMEM.


def _ceil_div(a: int, b: int) -> int:
    return -(-a // b)


def _identity_kernel(x_ref, o_ref):
    # Forward pass of BaseNet: return x  (element-wise identity, tile copy).
    o_ref[...] = x_ref[...]


def _identity_pallas_2d(x2d: jax.Array, tile_r: int) -> jax.Array:
    rows, lanes = x2d.shape
    return pl.pallas_call(
        _identity_kernel,
        out_shape=jax.ShapeDtypeStruct(x2d.shape, x2d.dtype),
        grid=(rows // tile_r,),
        in_specs=[pl.BlockSpec((tile_r, lanes), lambda i: (i, 0))],
        out_specs=pl.BlockSpec((tile_r, lanes), lambda i: (i, 0)),
        # Output aliases the input HBM buffer: no second allocation, and the
        # tile-wise in-place copy is safe (each tile maps onto itself).
        input_output_aliases={0: 0},
        compiler_params=pltpu.CompilerParams(
            # Row tiles are independent -> shard across the 2 TCs on v7x.
            dimension_semantics=("parallel",),
        ),
    )(x2d)


@jax.jit
def basenet_forward(x: jax.Array) -> jax.Array:
    """BaseNet.forward implemented as a tiled, lane-dense Pallas TPU copy.

    Accepts a tensor of any shape (e.g. NCHW); returns a tensor of identical
    shape/dtype whose values equal the input.
    """
    orig_shape = x.shape
    n = x.size
    if n == 0:
        return x

    flat = x.reshape(-1)

    rows = _ceil_div(n, _LANES)
    tile_r = min(_TILE_ROWS, rows)          # full-dim block for small inputs
    padded_rows = _ceil_div(rows, tile_r) * tile_r
    total = padded_rows * _LANES
    if total != n:
        flat = jnp.pad(flat, (0, total - n))

    x2d = flat.reshape(padded_rows, _LANES)
    y2d = _identity_pallas_2d(x2d, tile_r)

    return y2d.reshape(-1)[:n].reshape(orig_shape)


# NOTE: BaseNet defines no parameters of its own (it is an abstract base whose
# __init__ only stores hyper/logger), so there are no weights to initialize.
# initialize_weight / xfit / load_pretraing_file are training/IO utilities
# with no forward-pass compute.
# TODO(synk): predict() adds torch.argmax(logit, 1); not part of forward(), so
# it is not fused here.


if __name__ == "__main__":
    key = jax.random.PRNGKey(0)
    # Small NCHW input consistent with a conv-style network: (B=2, C=4, H=16, W=16)
    x = jax.random.normal(key, (2, 4, 16, 16), dtype=jnp.float32)

    y = basenet_forward(x)
    y = jax.block_until_ready(y)

    assert y.shape == x.shape and y.dtype == x.dtype
    assert bool(jnp.array_equal(y, x))
    print("KERNEL_OK")
</pallas_src>

<mosaic_0001>
module attributes {stable_mosaic.version = 11 : i64} {
  func.func @_identity_kernel(%arg0: i32, %arg1: memref<2x1024xf32, #tpu.memory_space<vmem>>, %arg2: memref<2x1024xf32, #tpu.memory_space<vmem>>) attributes {dimension_semantics = [#tpu.dimension_semantics<parallel>], iteration_bounds = array<i64: 1>, scalar_prefetch = 0 : i64, scratch_operands = 0 : i64, tpu.core_type = #tpu.core_type<tc>, window_params = [{transform_indices = @transform_0, window_bounds = array<i64: 2, 1024>}, {transform_indices = @transform_1, window_bounds = array<i64: 2, 1024>}]} {
    %c0 = arith.constant 0 : index
    %c0_0 = arith.constant 0 : index
    %0 = vector.load %arg1[%c0, %c0_0] : memref<2x1024xf32, #tpu.memory_space<vmem>>, vector<2x1024xf32>
    %c0_1 = arith.constant 0 : index
    %c0_2 = arith.constant 0 : index
    %1 = vector.load %arg2[%c0_1, %c0_2] : memref<2x1024xf32, #tpu.memory_space<vmem>>, vector<2x1024xf32>
    tpu.vector_store %arg2[%c0_1, %c0_2], %0 {strides = array<i32>} : memref<2x1024xf32, #tpu.memory_space<vmem>>, vector<2x1024xf32>,
    return
  }
  func.func @transform_0(%arg0: i32) -> (i32, i32) {
    %c0_i32 = arith.constant 0 : i32
    %c0_i32_0 = arith.constant 0 : i32
    return %arg0, %c0_i32 : i32, i32
  }
  func.func @transform_1(%arg0: i32) -> (i32, i32) {
    %c0_i32 = arith.constant 0 : i32
    %c0_i32_0 = arith.constant 0 : i32
    return %arg0, %c0_i32 : i32, i32
  }
}

</mosaic_0001>

<llo_original>
// kernel: basenet_forward.1
$region0: #{basenet_forward.1}
  #allocation0 [shape = 'u32[]', space=smem, size = 0x4, offset = 0x4, fixed_abs, tag = 'smem constant byte address 0x4 - core index']
  #allocation1 [shape = 'u32[144,128]{1,0:T(1,128)}', space=vmem, size = 0x12000, scoped, tag = 'internal scratch']
  %s0 = inlined_call_operand.vmem [shape: f32[2,1024], index: 0, kind: input, shape index: {}, may-alias: {0,1}]
  %s1 = inlined_call_operand.vmem [shape: f32[2,1024], index: 1, kind: output, shape index: {}, may-alias: {0,1}]
  %s2 = sld [smem:[#allocation0]]
  $region14: #{basenet_forward.1} parent=0
    _
  %s4 = ssub.s32 1, %s2
  %s5 = scalar_select 0, %s4, %s2
  // Predicated region
  $region2: #{basenet_forward.1} parent=0 // pred_check
    _
  $region3: #{basenet_forward.1} parent=0 // pred_check_branch
    %7 = sbr.rel (0) target = $region5
  $region4: #{basenet_forward.1} parent=0 // pred_region
    _
  $region5: #{basenet_forward.1} parent=0 // pred_fallthru
    _
  %v8 = vld [vmem:[%s0] sm:$0xff]
  %v9 = vld [vmem:[%s0 + $0x8] sm:$0xff]
  %10 = vst [vmem:[%s1] sm:$0xff] %v8
  %11 = vst [vmem:[%s1 + $0x8] sm:$0xff] %v9
  // Predicated region
  $region6: #{basenet_forward.1} parent=0 // pred_check
    _
  $region7: #{basenet_forward.1} parent=0 // pred_check_branch
    %13 = sbr.rel (0) target = $region9
  $region8: #{basenet_forward.1} parent=0 // pred_region
    _
  $region9: #{basenet_forward.1} parent=0 // pred_fallthru
    _
  // Predicated region
  $region10: #{basenet_forward.1} parent=0 // pred_check
    _
  $region11: #{basenet_forward.1} parent=0 // pred_check_branch
    %15 = sbr.rel (0) target = $region13
  $region12: #{basenet_forward.1} parent=0 // pred_region
    _
  $region13: #{basenet_forward.1} parent=0 // pred_fallthru
    _

</llo_original>
